<compile_context>
chip_gen: v7x
topology: tpu7x:2x2x1
jax: 0.10.0
libtpu: 0.0.40
codegen_flags: <defaults>
</compile_context>

<pallas_src>
import jax
import jax.numpy as jnp
from jax.experimental import pallas as pl
from jax.experimental.pallas import tpu as pltpu


def _round_up(x, m):
    return (x + m - 1) // m * m


def _ceil_div(a, b):
    return -(-a // b)


def residual_block_kernel(x_ref, wt_ref, b_ref, o_ref):
    """leaky_relu(x @ W^T + b + x) for one (TM, D) row-tile of x.

    wt_ref already holds the weight in (in, out) layout and bf16, prepared once
    in the wrapper, so the MXU sees a plain (TM,K)x(K,N) push; only the
    changing x tile is cast per step. Accumulation stays f32.
    """
    x = x_ref[...]                                          # (TM, D) f32
    y = jnp.dot(x.astype(jnp.bfloat16), wt_ref[...],
                preferred_element_type=jnp.float32)         # (TM, D) f32
    z = y + b_ref[...] + x                                  # bias (1, D) broadcast + residual
    # leaky_relu(negative_slope=0.01); max form == where form for slope < 1.
    o_ref[...] = jnp.maximum(z, 0.01 * z).astype(o_ref.dtype)


def _pick_tm(batch, tm_max=512, num_cores=2):
    """Row tile such that the grid has a core-balanced (even) number of steps
    with near-equal tiles, while staying large enough to amortize the
    ~0.35us per-grid-step overhead."""
    bp = _round_up(batch, 8)
    if bp <= 8 * num_cores:           # too small to split meaningfully
        return bp
    steps = max(num_cores, _ceil_div(bp, tm_max))
    steps = _round_up(steps, num_cores)            # even #steps -> balanced v7x TCs
    return _round_up(_ceil_div(bp, steps), 8)


def residual_block(x, weight, bias, *, tm_max=512):
    """x: (B, D) f32; weight: (D, D) in PyTorch (out, in) layout; bias: (D,)."""
    B, D = x.shape
    assert weight.shape == (D, D) and bias.shape == (D,)
    tm = _pick_tm(B, tm_max=tm_max)

    # One-time wrapper prep (one D^2 pass, amortized over all row tiles / calls):
    # transpose to (in, out) and cast to bf16 so the resident block needs no
    # per-step work inside the kernel.
    w_t = jnp.asarray(weight).T.astype(jnp.bfloat16)        # (D_in, D_out) bf16
    b2 = jnp.asarray(bias).reshape(1, D).astype(jnp.float32)

    # VMEM budget: bf16 weight (single buffer) + bias + double-buffered f32 x/out
    # row tiles + headroom; cap safely below v7x's 64 MiB physical VMEM.
    vmem_needed = (D * D * 2) + (D * 4) + 2 * (2 * tm * D * 4) + (4 << 20)
    vmem_limit = int(min(56 << 20, max(vmem_needed, 32 << 20)))

    grid = (pl.cdiv(B, tm),)
    out = pl.pallas_call(
        residual_block_kernel,
        out_shape=jax.ShapeDtypeStruct((B, D), x.dtype),
        grid_spec=pltpu.PrefetchScalarGridSpec(
            num_scalar_prefetch=0,
            grid=grid,
            in_specs=[
                pl.BlockSpec((tm, D), lambda i: (i, 0)),           # x row-tile, pipelined
                pl.BlockSpec((D, D), lambda i: (0, 0),
                             pipeline_mode=pl.Buffered(1)),        # resident weight, 1 buffer
                pl.BlockSpec((1, D), lambda i: (0, 0),
                             pipeline_mode=pl.Buffered(1)),        # resident bias, 1 buffer
            ],
            out_specs=pl.BlockSpec((tm, D), lambda i: (i, 0)),     # lane-dense output
        ),
        compiler_params=pltpu.CompilerParams(
            # Row axis is "parallel": shards grid steps across v7x's 2 TensorCores.
            dimension_semantics=("parallel",),
            vmem_limit_bytes=vmem_limit,
        ),
    )(x, w_t, b2)
    # NOTE: with bf16 + single-buffered weight the resident-weight strategy stays
    # viable up to D ~ 5K on v7x (64 MiB/TC); beyond that switch to a 3-D
    # (rows, N, K) grid with an f32 accumulator scratch.
    # TODO(synk): accepting bf16 x / emitting a bf16 output would halve the
    # dominant HBM traffic (op is memory-bound); kept f32 to preserve the
    # module's dtype contract.
    return out


def residual_block_ref(x, weight, bias):
    z = x @ weight.T + bias + x
    return jnp.where(z >= 0, z, 0.01 * z)


if __name__ == "__main__":
    key = jax.random.PRNGKey(0)
    kx, kw, kb = jax.random.split(key, 3)

    # D = input_dim; B chosen so the row grid has 2 balanced steps (tm=192),
    # exercising pipelining and the v7x megacore split.
    B, D = 384, 256
    x = jax.random.normal(kx, (B, D), dtype=jnp.float32)

    # Deterministic PyTorch-style Linear init: U(-1/sqrt(in), 1/sqrt(in))
    bound = 1.0 / jnp.sqrt(jnp.float32(D))
    weight = jax.random.uniform(kw, (D, D), jnp.float32, -bound, bound)
    bias = jax.random.uniform(kb, (D,), jnp.float32, -bound, bound)

    out = jax.block_until_ready(residual_block(x, weight, bias))
    ref = residual_block_ref(x, weight, bias)

    assert out.shape == (B, D)
    # bf16 MXU inputs with f32 accumulation (intentional precision trade for the
    # matmul feed) -> looser tolerance than a pure-f32 matmul.
    assert jnp.allclose(out, ref, atol=5e-2, rtol=5e-2), "mismatch vs reference"
    print("KERNEL_OK")
</pallas_src>

<mosaic_0001>
module attributes {stable_mosaic.version = 11 : i64} {
  func.func @residual_block_kernel(%arg0: i32, %arg1: memref<192x256xf32, #tpu.memory_space<vmem>>, %arg2: memref<256x256xbf16, #tpu.memory_space<vmem>>, %arg3: memref<1x256xf32, #tpu.memory_space<vmem>>, %arg4: memref<192x256xf32, #tpu.memory_space<vmem>>) attributes {dimension_semantics = [#tpu.dimension_semantics<parallel>], iteration_bounds = array<i64: 2>, scalar_prefetch = 0 : i64, scratch_operands = 0 : i64, tpu.core_type = #tpu.core_type<tc>, window_params = [{transform_indices = @transform_0, window_bounds = array<i64: 192, 256>}, {pipeline_mode = #tpu.pipeline_mode<synchronous>, transform_indices = @transform_1, window_bounds = array<i64: 256, 256>}, {pipeline_mode = #tpu.pipeline_mode<synchronous>, transform_indices = @transform_2, window_bounds = array<i64: 1, 256>}, {transform_indices = @transform_3, window_bounds = array<i64: 192, 256>}]} {
    %c0 = arith.constant 0 : index
    %c0_0 = arith.constant 0 : index
    %0 = vector.load %arg1[%c0, %c0_0] : memref<192x256xf32, #tpu.memory_space<vmem>>, vector<192x256xf32>
    %1 = arith.truncf %0 : vector<192x256xf32> to vector<192x256xbf16>
    %c0_1 = arith.constant 0 : index
    %c0_2 = arith.constant 0 : index
    %2 = vector.load %arg2[%c0_1, %c0_2] : memref<256x256xbf16, #tpu.memory_space<vmem>>, vector<256x256xbf16>
    %cst = arith.constant dense<0.000000e+00> : vector<192x256xf32>
    %3 = tpu.matmul %1, %2, %cst {dimension_numbers = #tpu.dot_dimension_numbers<[1], [0], [0], [1], [0, 0, 1, 1], [], []>} : vector<192x256xbf16>, vector<256x256xbf16>, vector<192x256xf32> -> vector<192x256xf32>
    %c0_3 = arith.constant 0 : index
    %c0_4 = arith.constant 0 : index
    %4 = vector.load %arg3[%c0_3, %c0_4] : memref<1x256xf32, #tpu.memory_space<vmem>>, vector<1x256xf32>
    %5 = vector.broadcast %4 : vector<1x256xf32> to vector<192x256xf32>
    %6 = arith.addf %3, %5 : vector<192x256xf32>
    %7 = arith.addf %6, %0 : vector<192x256xf32>
    %cst_5 = arith.constant 0.00999999977 : f32
    %8 = vector.broadcast %cst_5 : f32 to vector<192x256xf32>
    %9 = arith.mulf %8, %7 : vector<192x256xf32>
    %10 = arith.maximumf %7, %9 : vector<192x256xf32>
    %c0_6 = arith.constant 0 : index
    %c0_7 = arith.constant 0 : index
    %11 = vector.load %arg4[%c0_6, %c0_7] : memref<192x256xf32, #tpu.memory_space<vmem>>, vector<192x256xf32>
    tpu.vector_store %arg4[%c0_6, %c0_7], %10 {strides = array<i32>} : memref<192x256xf32, #tpu.memory_space<vmem>>, vector<192x256xf32>,
    return
  }
  func.func @transform_0(%arg0: i32) -> (i32, i32) {
    %c0_i32 = arith.constant 0 : i32
    %c0_i32_0 = arith.constant 0 : i32
    return %arg0, %c0_i32 : i32, i32
  }
  func.func @transform_1(%arg0: i32) -> (i32, i32) {
    %c0_i32 = arith.constant 0 : i32
    %c0_i32_0 = arith.constant 0 : i32
    %c0_i32_1 = arith.constant 0 : i32
    return %c0_i32, %c0_i32_0 : i32, i32
  }
  func.func @transform_2(%arg0: i32) -> (i32, i32) {
    %c0_i32 = arith.constant 0 : i32
    %c0_i32_0 = arith.constant 0 : i32
    %c0_i32_1 = arith.constant 0 : i32
    return %c0_i32, %c0_i32_0 : i32, i32
  }
  func.func @transform_3(%arg0: i32) -> (i32, i32) {
    %c0_i32 = arith.constant 0 : i32
    %c0_i32_0 = arith.constant 0 : i32
    return %arg0, %c0_i32 : i32, i32
  }
}

</mosaic_0001>

<llo_original>
// kernel: tpu_custom_call.1
$region0: #{tpu_custom_call.1}
  #allocation0 [shape = 'u32[]', space=smem, size = 0x4, offset = 0x4, fixed_abs, tag = 'smem constant byte address 0x4 - core index']
  #allocation1 [shape = 'u32[144,128]{1,0:T(1,128)}', space=vmem, size = 0x12000, scoped, tag = 'internal scratch']
  %s0 = inlined_call_operand.hbm [shape: f32[384,256], index: 0, kind: input, shape index: {}]
  %s1 = inlined_call_operand.hbm [shape: bf16[256,256], index: 1, kind: input, shape index: {}]
  %s2 = inlined_call_operand.vmem [shape: f32[1,256], index: 2, kind: input, shape index: {}]
  %s3 = inlined_call_operand.hbm [shape: f32[384,256], index: 3, kind: output, shape index: {}]
  %s4 = sld [smem:[#allocation0]]
  $region53: #{tpu_custom_call.1} parent=0
    _
  %s6 = ssub.s32 1, %s4
  %s7 = scalar_select 0, %s6, %s4
  $region1: #{tpu_custom_call.1} parent=0
    #allocation2 [shape = 'u8[393216]{0}', space=vmem, size = 0x60000, scoped, tag = 'input window, operand 0']
    #allocation3 [shape = 's32[2]{0}', space=sflag, size = 0x8, scoped, tag = 'scoped memory for tpu_custom_call.1']
    #allocation4 [shape = 's32[2]{0}', space=sflag, size = 0x8, scoped, tag = 'scoped memory for tpu_custom_call.1']
    #allocation5 [shape = 'u8[131072]{0}', space=vmem, size = 0x20000, scoped, tag = 'input window, operand 1, single buffered']
    #allocation6 [shape = 's32[1]{0}', space=sflag, size = 0x4, scoped, tag = 'scoped memory for tpu_custom_call.1']
    #allocation7 [shape = 'u8[393216]{0}', space=vmem, size = 0x60000, scoped, tag = 'output window, operand 0']
    %8 = vsyncpa [#allocation3], 0
    %s9 = scalar_lea.sflag [#allocation3], 1
    %10 = vsyncpa %s9, 0
    %11 = vsyncpa [#allocation6], 0
    %12 = vsyncpa [#allocation4], 0
    %s13 = scalar_lea.sflag [#allocation4], 1
    %14 = vsyncpa %s13, 0
    loop: start=0, step=1, limit=4
    $region2: #{tpu_custom_call.1} parent=1 // loop_pre_header
      _
    $region3: #{tpu_custom_call.1} parent=1 // loop_header
      %s16 = sphi 0, %s20
      %p17 = scmp.ge.s32.totalorder %s16, 4
      %s26 = sphi 0, %s28
      %s29 = sphi 0, %s26
      %s30 = sphi 0, %s29
      %s46 = sphi 0, %s30
      %s50 = sphi 0, %s50
      %s52 = sphi 0, %s50
      %s53 = sphi 0, %s52
      %s67 = sphi 0, %s53
      %s71 = sphi 0, %s71
      %s73 = sphi 0, %s71
      %s74 = sphi 0, %s73
      %s88 = sphi 0, %s74
      %s94 = sphi 0, %s96
      %s97 = sphi 0, %s94
      %s98 = sphi 0, %s97
      %s114 = sphi 0, %s98
    $region4: #{tpu_custom_call.1} parent=1 // loop_header_branch
      %19 = sbr.rel (%p17) target = $region8
    $region5: #{tpu_custom_call.1} parent=1 // loop_body
      %s21 = ssub.s32 %s16, 1
      %s22 = ssub.s32 %s16, 2
      %s23 = sadd.s32 %s16, 1
      %s24 = ssub.s32 %s16, %s23
      %p25 = scmp.eq.s32.totalorder %s24, 0
      %s27 = sadd.s32 %s26, 1
      %s28 = scalar_select %p25, %s26, %s27
      %p31 = pneg %p25
      %p32 = scmp.eq.s32.totalorder %s16, 1
      %p33 = por %p31, %p32
      %p34 = scmp.ne.s32.totalorder %s26, %s29
      %p35 = scmp.eq.s32.totalorder %s16, 0
      %p36 = por %p34, %p35
      %p37 = scmp.ne.s32.totalorder %s26, %s29
      %p38 = scmp.eq.s32.totalorder %s21, 1
      %p39 = por %p37, %p38
      %p40 = scmp.ne.s32.totalorder %s29, %s30
      %p41 = scmp.eq.s32.totalorder %s21, 0
      %p42 = por %p40, %p41
      %p43 = scmp.ne.s32.totalorder %s29, %s30
      %p44 = scmp.eq.s32.totalorder %s22, 1
      %p45 = por %p43, %p44
      %p47 = scmp.ne.s32.totalorder %s30, %s46
      %p48 = scmp.eq.s32.totalorder %s22, 0
      %p49 = por %p47, %p48
      %s51 = sadd.s32 %s50, 1
      %p54 = scmp.eq.s32.totalorder %s16, 1
      %p55 = scmp.ne.s32.totalorder %s50, %s52
      %p56 = scmp.eq.s32.totalorder %s16, 0
      %p57 = por %p55, %p56
      %p58 = scmp.ne.s32.totalorder %s50, %s52
      %p59 = scmp.eq.s32.totalorder %s21, 1
      %p60 = por %p58, %p59
      %p61 = scmp.ne.s32.totalorder %s52, %s53
      %p62 = scmp.eq.s32.totalorder %s21, 0
      %p63 = por %p61, %p62
      %p64 = scmp.ne.s32.totalorder %s52, %s53
      %p65 = scmp.eq.s32.totalorder %s22, 1
      %p66 = por %p64, %p65
      %p68 = scmp.ne.s32.totalorder %s53, %s67
      %p69 = scmp.eq.s32.totalorder %s22, 0
      %p70 = por %p68, %p69
      %s72 = sadd.s32 %s71, 1
      %p75 = scmp.eq.s32.totalorder %s16, 1
      %p76 = scmp.ne.s32.totalorder %s71, %s73
      %p77 = scmp.eq.s32.totalorder %s16, 0
      %p78 = por %p76, %p77
      %p79 = scmp.ne.s32.totalorder %s71, %s73
      %p80 = scmp.eq.s32.totalorder %s21, 1
      %p81 = por %p79, %p80
      %p82 = scmp.ne.s32.totalorder %s73, %s74
      %p83 = scmp.eq.s32.totalorder %s21, 0
      %p84 = por %p82, %p83
      %p85 = scmp.ne.s32.totalorder %s73, %s74
      %p86 = scmp.eq.s32.totalorder %s22, 1
      %p87 = por %p85, %p86
      %p89 = scmp.ne.s32.totalorder %s74, %s88
      %p90 = scmp.eq.s32.totalorder %s22, 0
      %p91 = por %p89, %p90
      %s92 = ssub.s32 %s16, %s23
      %p93 = scmp.eq.s32.totalorder %s92, 0
      %s95 = sadd.s32 %s94, 1
      %s96 = scalar_select %p93, %s94, %s95
      %p99 = pneg %p93
      %p100 = scmp.eq.s32.totalorder %s16, 1
      %p101 = por %p99, %p100
      %p102 = scmp.ne.s32.totalorder %s94, %s97
      %p103 = scmp.eq.s32.totalorder %s16, 0
      %p104 = por %p102, %p103
      %p105 = scmp.ne.s32.totalorder %s94, %s97
      %p106 = scmp.eq.s32.totalorder %s21, 1
      %p107 = por %p105, %p106
      %p108 = scmp.ne.s32.totalorder %s97, %s98
      %p109 = scmp.eq.s32.totalorder %s21, 0
      %p110 = por %p108, %p109
      %p111 = scmp.ne.s32.totalorder %s97, %s98
      %p112 = scmp.eq.s32.totalorder %s22, 1
      %p113 = por %p111, %p112
      %p115 = scmp.ne.s32.totalorder %s98, %s114
      %p116 = scmp.eq.s32.totalorder %s22, 0
      %p117 = por %p115, %p116
      %p118 = scmp.le.s32.totalorder 1, %s16
      %p119 = scmp.lt.s32.totalorder %s16, 3
      %p120 = pnand %p118, %p119
      %p121 = pneg %p120
      // Predicated region
      $region9: #{tpu_custom_call.1} parent=5 // pred_check
        _
      $region10: #{tpu_custom_call.1} parent=5 // pred_check_branch
        %123 = sbr.rel (%p120) target = $region12
      $region11: #{tpu_custom_call.1} parent=5 // pred_region
        %s124 = ssub.s32 %s16, 1
        // Predicated region
        $region13: #{tpu_custom_call.1} parent=11 // pred_check
          %p125 = pneg %p63
        $region14: #{tpu_custom_call.1} parent=11 // pred_check_branch
          %127 = sbr.rel (%p125) target = $region16
        $region15: #{tpu_custom_call.1} parent=11 // pred_region
          %s129 = ssub.s32 4096, 4096
          %130 = vsyncadd [#allocation6], %s129
          %s131 = sshll.u32 [#allocation5], 4
          %s132 = int_to_ptr.vmem [resolvable:$true] %s131
          %137 = dma.hbm_to_vmem [thread:$0]  %s1, 4096, %s132, [#allocation6], 128, 128, 8
        $region16: #{tpu_custom_call.1} parent=11 // pred_fallthru
          _
        // Predicated region
        $region17: #{tpu_custom_call.1} parent=11 // pred_check
          %p138 = pneg %p84
        $region18: #{tpu_custom_call.1} parent=11 // pred_check_branch
          %140 = sbr.rel (%p138) target = $region20
        $region19: #{tpu_custom_call.1} parent=11 // pred_region
          _
        $region20: #{tpu_custom_call.1} parent=11 // pred_fallthru
          _
      $region12: #{tpu_custom_call.1} parent=5 // pred_fallthru
        _
      %p141 = scmp.lt.s32.totalorder %s16, 2
      // Predicated region
      $region21: #{tpu_custom_call.1} parent=5 // pred_check
        %p142 = pneg %p141
      $region22: #{tpu_custom_call.1} parent=5 // pred_check_branch
        %144 = sbr.rel (%p142) target = $region24
      $region23: #{tpu_custom_call.1} parent=5 // pred_region
        // Predicated region
        $region25: #{tpu_custom_call.1} parent=23 // pred_check
          %p145 = pneg %p36
        $region26: #{tpu_custom_call.1} parent=23 // pred_check_branch
          %147 = sbr.rel (%p145) target = $region28
        $region27: #{tpu_custom_call.1} parent=23 // pred_region
          %s148 = sand.u32 %s26, 1
          %s149 = scalar_lea.sflag [#allocation3], %s148
          %s150 = sand.u32 %s26, 1
          %s151 = smul.addr %s150, 384
          %s152 = scalar_lea.vmem [#allocation2], %s151
          %s153 = smul.u32 24, %s16
          %s155 = ssub.s32 6144, 6144
          %156 = vsyncadd %s149, %s155
          %s157 = smul.addr %s153, 2
          %s158 = smul.addr %s157, 128
          %s159 = scalar_lea.hbm %s0, %s158
          %s160 = sshll.u32 %s152, 4
          %s161 = int_to_ptr.vmem [resolvable:$true] %s160
          %166 = dma.hbm_to_vmem [thread:$0]  %s159, 6144, %s161, %s149, 256, 256, 16
        $region28: #{tpu_custom_call.1} parent=23 // pred_fallthru
          _
      $region24: #{tpu_custom_call.1} parent=5 // pred_fallthru
        _
      %p167 = scmp.le.s32.totalorder 1, %s16
      %p168 = scmp.lt.s32.totalorder %s16, 3
      %p169 = pnand %p167, %p168
      %p170 = pneg %p169
      // Predicated region
      $region29: #{tpu_custom_call.1} parent=5 // pred_check
        _
      $region30: #{tpu_custom_call.1} parent=5 // pred_check_branch
        %172 = sbr.rel (%p169) target = $region32
      $region31: #{tpu_custom_call.1} parent=5 // pred_region
        %s173 = ssub.s32 %s16, 1
        %s174 = sand.u32 %s29, 1
        %s175 = scalar_lea.sflag [#allocation3], %s174
        %s176 = sand.u32 %s29, 1
        %s177 = smul.addr %s176, 384
        %s178 = scalar_lea.vmem [#allocation2], %s177
        // Predicated region
        $region33: #{tpu_custom_call.1} parent=31 // pred_check
          %p179 = pneg %p42
        $region34: #{tpu_custom_call.1} parent=31 // pred_check_branch
          %181 = sbr.rel (%p179) target = $region36
        $region35: #{tpu_custom_call.1} parent=31 // pred_region
          %182 = dma.done %s175, 6144
        $region36: #{tpu_custom_call.1} parent=31 // pred_fallthru
          _
        // Predicated region
        $region37: #{tpu_custom_call.1} parent=31 // pred_check
          %p183 = pneg %p63
        $region38: #{tpu_custom_call.1} parent=31 // pred_check_branch
          %185 = sbr.rel (%p183) target = $region40
        $region39: #{tpu_custom_call.1} parent=31 // pred_region
          %186 = dma.done [#allocation6], 4096
        $region40: #{tpu_custom_call.1} parent=31 // pred_fallthru
          _
        %s187 = sand.u32 %s29, 1
        %s188 = scalar_lea.sflag [#allocation3], %s187
        %s189 = sand.u32 %s29, 1
        %s190 = smul.addr %s189, 384
        %s191 = scalar_lea.vmem [#allocation2], %s190
        %p192 = pneg %p42
        %p193 = pneg %p39
        %p194 = pneg %p63
        %p195 = pneg %p60
        %p196 = pneg %p84
        %p197 = pneg %p81
        %p198 = pneg %p110
        %p199 = pneg %p107
        %s200 = sand.u32 %s97, 1
        %s201 = scalar_lea.sflag [#allocation4], %s200
        %s202 = sand.u32 %s97, 1
        %s203 = smul.addr %s202, 384
        %s204 = scalar_lea.vmem [#allocation7], %s203
        %s205 = smul.u32 24, %s21
        %s206 = smul.u32 24, %s21
        %v207 = vld [vmem:[%s178] sm:$0xff]
        %v208 = vld [vmem:[%s178 + $0x8] sm:$0xff]
        %v209 = vld [vmem:[%s178 + $0x10] sm:$0xff]
        %v210 = vld [vmem:[%s178 + $0x18] sm:$0xff]
        %v211 = vld [vmem:[%s178 + $0x20] sm:$0xff]
        %v212 = vld [vmem:[%s178 + $0x28] sm:$0xff]
        %v213 = vld [vmem:[%s178 + $0x30] sm:$0xff]
        %v214 = vld [vmem:[%s178 + $0x38] sm:$0xff]
        %v215 = vld [vmem:[%s178 + $0x40] sm:$0xff]
        %v216 = vld [vmem:[%s178 + $0x48] sm:$0xff]
        %v217 = vld [vmem:[%s178 + $0x50] sm:$0xff]
        %v218 = vld [vmem:[%s178 + $0x58] sm:$0xff]
        %v219 = vld [vmem:[%s178 + $0x60] sm:$0xff]
        %v220 = vld [vmem:[%s178 + $0x68] sm:$0xff]
        %v221 = vld [vmem:[%s178 + $0x70] sm:$0xff]
        %v222 = vld [vmem:[%s178 + $0x78] sm:$0xff]
        %v223 = vld [vmem:[%s178 + $0x80] sm:$0xff]
        %v224 = vld [vmem:[%s178 + $0x88] sm:$0xff]
        %v225 = vld [vmem:[%s178 + $0x90] sm:$0xff]
        %v226 = vld [vmem:[%s178 + $0x98] sm:$0xff]
        %v227 = vld [vmem:[%s178 + $0xa0] sm:$0xff]
        %v228 = vld [vmem:[%s178 + $0xa8] sm:$0xff]
        %v229 = vld [vmem:[%s178 + $0xb0] sm:$0xff]
        %v230 = vld [vmem:[%s178 + $0xb8] sm:$0xff]
        %v231 = vld [vmem:[%s178 + $0xc0] sm:$0xff]
        %v232 = vld [vmem:[%s178 + $0xc8] sm:$0xff]
        %v233 = vld [vmem:[%s178 + $0xd0] sm:$0xff]
        %v234 = vld [vmem:[%s178 + $0xd8] sm:$0xff]
        %v235 = vld [vmem:[%s178 + $0xe0] sm:$0xff]
        %v236 = vld [vmem:[%s178 + $0xe8] sm:$0xff]
        %v237 = vld [vmem:[%s178 + $0xf0] sm:$0xff]
        %v238 = vld [vmem:[%s178 + $0xf8] sm:$0xff]
        %v239 = vld [vmem:[%s178 + $0x100] sm:$0xff]
        %v240 = vld [vmem:[%s178 + $0x108] sm:$0xff]
        %v241 = vld [vmem:[%s178 + $0x110] sm:$0xff]
        %v242 = vld [vmem:[%s178 + $0x118] sm:$0xff]
        %v243 = vld [vmem:[%s178 + $0x120] sm:$0xff]
        %v244 = vld [vmem:[%s178 + $0x128] sm:$0xff]
        %v245 = vld [vmem:[%s178 + $0x130] sm:$0xff]
        %v246 = vld [vmem:[%s178 + $0x138] sm:$0xff]
        %v247 = vld [vmem:[%s178 + $0x140] sm:$0xff]
        %v248 = vld [vmem:[%s178 + $0x148] sm:$0xff]
        %v249 = vld [vmem:[%s178 + $0x150] sm:$0xff]
        %v250 = vld [vmem:[%s178 + $0x158] sm:$0xff]
        %v251 = vld [vmem:[%s178 + $0x160] sm:$0xff]
        %v252 = vld [vmem:[%s178 + $0x168] sm:$0xff]
        %v253 = vld [vmem:[%s178 + $0x170] sm:$0xff]
        %v254 = vld [vmem:[%s178 + $0x178] sm:$0xff]
        %v255 = vpack.c.bf16 %v209, %v207
        %v256 = vpack.c.bf16 %v210, %v208
        %v257 = vpack.c.bf16 %v213, %v211
        %v258 = vpack.c.bf16 %v214, %v212
        %v259 = vpack.c.bf16 %v217, %v215
        %v260 = vpack.c.bf16 %v218, %v216
        %v261 = vpack.c.bf16 %v221, %v219
        %v262 = vpack.c.bf16 %v222, %v220
        %v263 = vpack.c.bf16 %v225, %v223
        %v264 = vpack.c.bf16 %v226, %v224
        %v265 = vpack.c.bf16 %v229, %v227
        %v266 = vpack.c.bf16 %v230, %v228
        %v267 = vpack.c.bf16 %v233, %v231
        %v268 = vpack.c.bf16 %v234, %v232
        %v269 = vpack.c.bf16 %v237, %v235
        %v270 = vpack.c.bf16 %v238, %v236
        %v271 = vpack.c.bf16 %v241, %v239
        %v272 = vpack.c.bf16 %v242, %v240
        %v273 = vpack.c.bf16 %v245, %v243
        %v274 = vpack.c.bf16 %v246, %v244
        %v275 = vpack.c.bf16 %v249, %v247
        %v276 = vpack.c.bf16 %v250, %v248
        %v277 = vpack.c.bf16 %v253, %v251
        %v278 = vpack.c.bf16 %v254, %v252
        %v279 = vld [vmem:[#allocation5] sm:$0xff]
        %v280 = vld [vmem:[#allocation5 + $0x8] sm:$0xff]
        %v281 = vld [vmem:[#allocation5 + $0x10] sm:$0xff]
        %v282 = vld [vmem:[#allocation5 + $0x18] sm:$0xff]
        %v283 = vld [vmem:[#allocation5 + $0x20] sm:$0xff]
        %v284 = vld [vmem:[#allocation5 + $0x28] sm:$0xff]
        %v285 = vld [vmem:[#allocation5 + $0x30] sm:$0xff]
        %v286 = vld [vmem:[#allocation5 + $0x38] sm:$0xff]
        %v287 = vld [vmem:[#allocation5 + $0x40] sm:$0xff]
        %v288 = vld [vmem:[#allocation5 + $0x48] sm:$0xff]
        %v289 = vld [vmem:[#allocation5 + $0x50] sm:$0xff]
        %v290 = vld [vmem:[#allocation5 + $0x58] sm:$0xff]
        %v291 = vld [vmem:[#allocation5 + $0x60] sm:$0xff]
        %v292 = vld [vmem:[#allocation5 + $0x68] sm:$0xff]
        %v293 = vld [vmem:[#allocation5 + $0x70] sm:$0xff]
        %v294 = vld [vmem:[#allocation5 + $0x78] sm:$0xff]
        %v295 = vld [vmem:[#allocation5 + $0x80] sm:$0xff]
        %v296 = vld [vmem:[#allocation5 + $0x88] sm:$0xff]
        %v297 = vld [vmem:[#allocation5 + $0x90] sm:$0xff]
        %v298 = vld [vmem:[#allocation5 + $0x98] sm:$0xff]
        %v299 = vld [vmem:[#allocation5 + $0xa0] sm:$0xff]
        %v300 = vld [vmem:[#allocation5 + $0xa8] sm:$0xff]
        %v301 = vld [vmem:[#allocation5 + $0xb0] sm:$0xff]
        %v302 = vld [vmem:[#allocation5 + $0xb8] sm:$0xff]
        %v303 = vld [vmem:[#allocation5 + $0xc0] sm:$0xff]
        %v304 = vld [vmem:[#allocation5 + $0xc8] sm:$0xff]
        %v305 = vld [vmem:[#allocation5 + $0xd0] sm:$0xff]
        %v306 = vld [vmem:[#allocation5 + $0xd8] sm:$0xff]
        %v307 = vld [vmem:[#allocation5 + $0xe0] sm:$0xff]
        %v308 = vld [vmem:[#allocation5 + $0xe8] sm:$0xff]
        %v309 = vld [vmem:[#allocation5 + $0xf0] sm:$0xff]
        %v310 = vld [vmem:[#allocation5 + $0xf8] sm:$0xff]
        %v311 = vld [vmem:[%s2] sm:$0x3]
        %v313 = vlaneseq
        %v314 = vshrl.u32 %v313, 7
        %v315 = vsub.s32 0, %v314
        %v316 = vrot.slane %v311, %v315
        %v317 = vlaneseq
        %v318 = vshrl.u32 %v317, 7
        %v319 = vsub.s32 1, %v318
        %v320 = vrot.slane %v311, %v319
        %v355 = vunpack.c.l.b16 %v279
        %v356 = vunpack.c.h.b16 %v279
        %v357 = vunpack.c.l.b16 %v280
        %v358 = vunpack.c.h.b16 %v280
        %v359 = vunpack.c.l.b16 %v281
        %v360 = vunpack.c.h.b16 %v281
        %v361 = vunpack.c.l.b16 %v282
        %v362 = vunpack.c.h.b16 %v282
        %v363 = vunpack.c.l.b16 %v283
        %v364 = vunpack.c.h.b16 %v283
        %v365 = vunpack.c.l.b16 %v284
        %v366 = vunpack.c.h.b16 %v284
        %v367 = vunpack.c.l.b16 %v285
        %v368 = vunpack.c.h.b16 %v285
        %v369 = vunpack.c.l.b16 %v286
        %v370 = vunpack.c.h.b16 %v286
        %v371 = vunpack.c.l.b16 %v287
        %v372 = vunpack.c.h.b16 %v287
        %v373 = vunpack.c.l.b16 %v288
        %v374 = vunpack.c.h.b16 %v288
        %v375 = vunpack.c.l.b16 %v289
        %v376 = vunpack.c.h.b16 %v289
        %v377 = vunpack.c.l.b16 %v290
        %v378 = vunpack.c.h.b16 %v290
        %v379 = vunpack.c.l.b16 %v291
        %v380 = vunpack.c.h.b16 %v291
        %v381 = vunpack.c.l.b16 %v292
        %v382 = vunpack.c.h.b16 %v292
        %v383 = vunpack.c.l.b16 %v293
        %v384 = vunpack.c.h.b16 %v293
        %v385 = vunpack.c.l.b16 %v294
        %v386 = vunpack.c.h.b16 %v294
        %v387 = vunpack.c.l.b16 %v295
        %v388 = vunpack.c.h.b16 %v295
        %v389 = vunpack.c.l.b16 %v296
        %v390 = vunpack.c.h.b16 %v296
        %v391 = vunpack.c.l.b16 %v297
        %v392 = vunpack.c.h.b16 %v297
        %v393 = vunpack.c.l.b16 %v298
        %v394 = vunpack.c.h.b16 %v298
        %v395 = vunpack.c.l.b16 %v299
        %v396 = vunpack.c.h.b16 %v299
        %v397 = vunpack.c.l.b16 %v300
        %v398 = vunpack.c.h.b16 %v300
        %v399 = vunpack.c.l.b16 %v301
        %v400 = vunpack.c.h.b16 %v301
        %v401 = vunpack.c.l.b16 %v302
        %v402 = vunpack.c.h.b16 %v302
        %v403 = vunpack.c.l.b16 %v303
        %v404 = vunpack.c.h.b16 %v303
        %v405 = vunpack.c.l.b16 %v304
        %v406 = vunpack.c.h.b16 %v304
        %v407 = vunpack.c.l.b16 %v305
        %v408 = vunpack.c.h.b16 %v305
        %v409 = vunpack.c.l.b16 %v306
        %v410 = vunpack.c.h.b16 %v306
        %v411 = vunpack.c.l.b16 %v307
        %v412 = vunpack.c.h.b16 %v307
        %v413 = vunpack.c.l.b16 %v308
        %v414 = vunpack.c.h.b16 %v308
        %v415 = vunpack.c.l.b16 %v309
        %v416 = vunpack.c.h.b16 %v309
        %v417 = vunpack.c.l.b16 %v310
        %v418 = vunpack.c.h.b16 %v310
        %v419 = vpack.c.b16 %v357, %v355
        %v420 = vpack.c.b16 %v358, %v356
        %v421 = vpack.c.b16 %v361, %v359
        %v422 = vpack.c.b16 %v362, %v360
        %v423 = vpack.c.b16 %v365, %v363
        %v424 = vpack.c.b16 %v366, %v364
        %v425 = vpack.c.b16 %v369, %v367
        %v426 = vpack.c.b16 %v370, %v368
        %v427 = vpack.c.b16 %v373, %v371
        %v428 = vpack.c.b16 %v374, %v372
        %v429 = vpack.c.b16 %v377, %v375
        %v430 = vpack.c.b16 %v378, %v376
        %v431 = vpack.c.b16 %v381, %v379
        %v432 = vpack.c.b16 %v382, %v380
        %v433 = vpack.c.b16 %v385, %v383
        %v434 = vpack.c.b16 %v386, %v384
        %v435 = vpack.c.b16 %v389, %v387
        %v436 = vpack.c.b16 %v390, %v388
        %v437 = vpack.c.b16 %v393, %v391
        %v438 = vpack.c.b16 %v394, %v392
        %v439 = vpack.c.b16 %v397, %v395
        %v440 = vpack.c.b16 %v398, %v396
        %v441 = vpack.c.b16 %v401, %v399
        %v442 = vpack.c.b16 %v402, %v400
        %v443 = vpack.c.b16 %v405, %v403
        %v444 = vpack.c.b16 %v406, %v404
        %v445 = vpack.c.b16 %v409, %v407
        %v446 = vpack.c.b16 %v410, %v408
        %v447 = vpack.c.b16 %v413, %v411
        %v448 = vpack.c.b16 %v414, %v412
        %v449 = vpack.c.b16 %v417, %v415
        %v450 = vpack.c.b16 %v418, %v416
        %483 = vmatprep.subr.bf16.mxu0 %v420
        %484 = vmatpush1.bf16.msra.mxu0 %v419
        %485 = vmatprep.subr.bf16.mxu0 %v422
        %486 = vmatpush1.bf16.msra.mxu0 %v421
        %487 = vmatprep.subr.bf16.mxu0 %v424
        %488 = vmatpush1.bf16.msra.mxu0 %v423
        %489 = vmatprep.subr.bf16.mxu0 %v426
        %490 = vmatpush1.bf16.msra.mxu0 %v425
        %491 = vmatprep.subr.bf16.mxu0 %v428
        %492 = vmatpush1.bf16.msra.mxu0 %v427
        %493 = vmatprep.subr.bf16.mxu0 %v430
        %494 = vmatpush1.bf16.msra.mxu0 %v429
        %495 = vmatprep.subr.bf16.mxu0 %v432
        %496 = vmatpush1.bf16.msra.mxu0 %v431
        %497 = vmatprep.subr.bf16.mxu0 %v434
        %498 = vmatpush1.bf16.msra.mxu0 %v433
        %499 = vmatprep.subr.bf16.mxu0 %v436
        %500 = vmatpush1.bf16.msra.mxu0 %v435
        %501 = vmatprep.subr.bf16.mxu0 %v438
        %502 = vmatpush1.bf16.msra.mxu0 %v437
        %503 = vmatprep.subr.bf16.mxu0 %v440
        %504 = vmatpush1.bf16.msra.mxu0 %v439
        %505 = vmatprep.subr.bf16.mxu0 %v442
        %506 = vmatpush1.bf16.msra.mxu0 %v441
        %507 = vmatprep.subr.bf16.mxu0 %v444
        %508 = vmatpush1.bf16.msra.mxu0 %v443
        %509 = vmatprep.subr.bf16.mxu0 %v446
        %510 = vmatpush1.bf16.msra.mxu0 %v445
        %511 = vmatprep.subr.bf16.mxu0 %v448
        %512 = vmatpush1.bf16.msra.mxu0 %v447
        %513 = vmatprep.subr.bf16.mxu0 %v450
        %514 = vmatpush1.bf16.msra.mxu0 %v449
        %515 = vmatprep.mubr.bf16.mxu0 %v256
        %516 = vmatmul.mubr.bf16.gmra.mrb[0].mxu0 %v255
        %v517 = vpop.f32.mrb[0].mxu0
        %v518 = vadd.f32 %v316, %v517
        %v519 = vpop.f32.mrb[0].mxu0
        %v520 = vadd.f32 %v320, %v519
        %v521 = vpop.f32.mrb[0].mxu0
        %v522 = vadd.f32 %v316, %v521
        %v523 = vpop.f32.mrb[0].mxu0
        %v524 = vadd.f32 %v320, %v523
        %525 = vmatprep.mubr.bf16.mxu0 %v258
        %526 = vmatmul.mubr.bf16.gmra.mrb[0].mxu0 %v257
        %v527 = vpop.f32.mrb[0].mxu0
        %v528 = vadd.f32 %v316, %v527
        %v529 = vpop.f32.mrb[0].mxu0
        %v530 = vadd.f32 %v320, %v529
        %v531 = vpop.f32.mrb[0].mxu0
        %v532 = vadd.f32 %v316, %v531
        %v533 = vpop.f32.mrb[0].mxu0
        %v534 = vadd.f32 %v320, %v533
        %535 = vmatprep.mubr.bf16.mxu0 %v260
        %536 = vmatmul.mubr.bf16.gmra.mrb[0].mxu0 %v259
        %v537 = vpop.f32.mrb[0].mxu0
        %v538 = vadd.f32 %v316, %v537
        %v539 = vpop.f32.mrb[0].mxu0
        %v540 = vadd.f32 %v320, %v539
        %v541 = vpop.f32.mrb[0].mxu0
        %v542 = vadd.f32 %v316, %v541
        %v543 = vpop.f32.mrb[0].mxu0
        %v544 = vadd.f32 %v320, %v543
        %545 = vmatprep.mubr.bf16.mxu0 %v262
        %546 = vmatmul.mubr.bf16.gmra.mrb[0].mxu0 %v261
        %v547 = vpop.f32.mrb[0].mxu0
        %v548 = vadd.f32 %v316, %v547
        %v549 = vpop.f32.mrb[0].mxu0
        %v550 = vadd.f32 %v320, %v549
        %v551 = vpop.f32.mrb[0].mxu0
        %v552 = vadd.f32 %v316, %v551
        %v553 = vpop.f32.mrb[0].mxu0
        %v554 = vadd.f32 %v320, %v553
        %555 = vmatprep.mubr.bf16.mxu0 %v264
        %556 = vmatmul.mubr.bf16.gmra.mrb[0].mxu0 %v263
        %v557 = vpop.f32.mrb[0].mxu0
        %v558 = vadd.f32 %v316, %v557
        %v559 = vpop.f32.mrb[0].mxu0
        %v560 = vadd.f32 %v320, %v559
        %v561 = vpop.f32.mrb[0].mxu0
        %v562 = vadd.f32 %v316, %v561
        %v563 = vpop.f32.mrb[0].mxu0
        %v564 = vadd.f32 %v320, %v563
        %565 = vmatprep.mubr.bf16.mxu0 %v266
        %566 = vmatmul.mubr.bf16.gmra.mrb[0].mxu0 %v265
        %v567 = vpop.f32.mrb[0].mxu0
        %v568 = vadd.f32 %v316, %v567
        %v569 = vpop.f32.mrb[0].mxu0
        %v570 = vadd.f32 %v320, %v569
        %v571 = vpop.f32.mrb[0].mxu0
        %v572 = vadd.f32 %v316, %v571
        %v573 = vpop.f32.mrb[0].mxu0
        %v574 = vadd.f32 %v320, %v573
        %575 = vmatprep.mubr.bf16.mxu0 %v268
        %576 = vmatmul.mubr.bf16.gmra.mrb[0].mxu0 %v267
        %v577 = vpop.f32.mrb[0].mxu0
        %v578 = vadd.f32 %v316, %v577
        %v579 = vpop.f32.mrb[0].mxu0
        %v580 = vadd.f32 %v320, %v579
        %v581 = vpop.f32.mrb[0].mxu0
        %v582 = vadd.f32 %v316, %v581
        %v583 = vpop.f32.mrb[0].mxu0
        %v584 = vadd.f32 %v320, %v583
        %585 = vmatprep.mubr.bf16.mxu0 %v270
        %586 = vmatmul.mubr.bf16.gmra.mrb[0].mxu0 %v269
        %v587 = vpop.f32.mrb[0].mxu0
        %v588 = vadd.f32 %v316, %v587
        %v589 = vpop.f32.mrb[0].mxu0
        %v590 = vadd.f32 %v320, %v589
        %v591 = vpop.f32.mrb[0].mxu0
        %v592 = vadd.f32 %v316, %v591
        %v593 = vpop.f32.mrb[0].mxu0
        %v594 = vadd.f32 %v320, %v593
        %595 = vmatprep.mubr.bf16.mxu0 %v272
        %596 = vmatmul.mubr.bf16.gmra.mrb[0].mxu0 %v271
        %v597 = vpop.f32.mrb[0].mxu0
        %v598 = vadd.f32 %v316, %v597
        %v599 = vpop.f32.mrb[0].mxu0
        %v600 = vadd.f32 %v320, %v599
        %v601 = vpop.f32.mrb[0].mxu0
        %v602 = vadd.f32 %v316, %v601
        %v603 = vpop.f32.mrb[0].mxu0
        %v604 = vadd.f32 %v320, %v603
        %605 = vmatprep.mubr.bf16.mxu0 %v274
        %606 = vmatmul.mubr.bf16.gmra.mrb[0].mxu0 %v273
        %v607 = vpop.f32.mrb[0].mxu0
        %v608 = vadd.f32 %v316, %v607
        %v609 = vpop.f32.mrb[0].mxu0
        %v610 = vadd.f32 %v320, %v609
        %v611 = vpop.f32.mrb[0].mxu0
        %v612 = vadd.f32 %v316, %v611
        %v613 = vpop.f32.mrb[0].mxu0
        %v614 = vadd.f32 %v320, %v613
        %615 = vmatprep.mubr.bf16.mxu0 %v276
        %616 = vmatmul.mubr.bf16.gmra.mrb[0].mxu0 %v275
        %v617 = vpop.f32.mrb[0].mxu0
        %v618 = vadd.f32 %v316, %v617
        %v619 = vpop.f32.mrb[0].mxu0
        %v620 = vadd.f32 %v320, %v619
        %v621 = vpop.f32.mrb[0].mxu0
        %v622 = vadd.f32 %v316, %v621
        %v623 = vpop.f32.mrb[0].mxu0
        %v624 = vadd.f32 %v320, %v623
        %625 = vmatprep.mubr.bf16.mxu0 %v278
        %626 = vmatmul.mubr.bf16.gmra.mrb[0].mxu0 %v277
        %v627 = vpop.f32.mrb[0].mxu0
        %v628 = vadd.f32 %v316, %v627
        %v629 = vpop.f32.mrb[0].mxu0
        %v630 = vadd.f32 %v320, %v629
        %v631 = vpop.f32.mrb[0].mxu0
        %v632 = vadd.f32 %v316, %v631
        %v633 = vpop.f32.mrb[0].mxu0
        %v634 = vadd.f32 %v320, %v633
        %635 = vdwg.mxu0
        %v636 = vadd.f32 %v518, %v207
        %v637 = vadd.f32 %v520, %v208
        %v638 = vadd.f32 %v522, %v209
        %v639 = vadd.f32 %v524, %v210
        %v640 = vadd.f32 %v528, %v211
        %v641 = vadd.f32 %v530, %v212
        %v642 = vadd.f32 %v532, %v213
        %v643 = vadd.f32 %v534, %v214
        %v644 = vadd.f32 %v538, %v215
        %v645 = vadd.f32 %v540, %v216
        %v646 = vadd.f32 %v542, %v217
        %v647 = vadd.f32 %v544, %v218
        %v648 = vadd.f32 %v548, %v219
        %v649 = vadd.f32 %v550, %v220
        %v650 = vadd.f32 %v552, %v221
        %v651 = vadd.f32 %v554, %v222
        %v652 = vadd.f32 %v558, %v223
        %v653 = vadd.f32 %v560, %v224
        %v654 = vadd.f32 %v562, %v225
        %v655 = vadd.f32 %v564, %v226
        %v656 = vadd.f32 %v568, %v227
        %v657 = vadd.f32 %v570, %v228
        %v658 = vadd.f32 %v572, %v229
        %v659 = vadd.f32 %v574, %v230
        %v660 = vadd.f32 %v578, %v231
        %v661 = vadd.f32 %v580, %v232
        %v662 = vadd.f32 %v582, %v233
        %v663 = vadd.f32 %v584, %v234
        %v664 = vadd.f32 %v588, %v235
        %v665 = vadd.f32 %v590, %v236
        %v666 = vadd.f32 %v592, %v237
        %v667 = vadd.f32 %v594, %v238
        %v668 = vadd.f32 %v598, %v239
        %v669 = vadd.f32 %v600, %v240
        %v670 = vadd.f32 %v602, %v241
        %v671 = vadd.f32 %v604, %v242
        %v672 = vadd.f32 %v608, %v243
        %v673 = vadd.f32 %v610, %v244
        %v674 = vadd.f32 %v612, %v245
        %v675 = vadd.f32 %v614, %v246
        %v676 = vadd.f32 %v618, %v247
        %v677 = vadd.f32 %v620, %v248
        %v678 = vadd.f32 %v622, %v249
        %v679 = vadd.f32 %v624, %v250
        %v680 = vadd.f32 %v628, %v251
        %v681 = vadd.f32 %v630, %v252
        %v682 = vadd.f32 %v632, %v253
        %v683 = vadd.f32 %v634, %v254
        %v684 = vmul.f32 %v636, 0.01
        %v685 = vmul.f32 %v637, 0.01
        %v686 = vmul.f32 %v638, 0.01
        %v687 = vmul.f32 %v639, 0.01
        %v688 = vmul.f32 %v640, 0.01
        %v689 = vmul.f32 %v641, 0.01
        %v690 = vmul.f32 %v642, 0.01
        %v691 = vmul.f32 %v643, 0.01
        %v692 = vmul.f32 %v644, 0.01
        %v693 = vmul.f32 %v645, 0.01
        %v694 = vmul.f32 %v646, 0.01
        %v695 = vmul.f32 %v647, 0.01
        %v696 = vmul.f32 %v648, 0.01
        %v697 = vmul.f32 %v649, 0.01
        %v698 = vmul.f32 %v650, 0.01
        %v699 = vmul.f32 %v651, 0.01
        %v700 = vmul.f32 %v652, 0.01
        %v701 = vmul.f32 %v653, 0.01
        %v702 = vmul.f32 %v654, 0.01
        %v703 = vmul.f32 %v655, 0.01
        %v704 = vmul.f32 %v656, 0.01
        %v705 = vmul.f32 %v657, 0.01
        %v706 = vmul.f32 %v658, 0.01
        %v707 = vmul.f32 %v659, 0.01
        %v708 = vmul.f32 %v660, 0.01
        %v709 = vmul.f32 %v661, 0.01
        %v710 = vmul.f32 %v662, 0.01
        %v711 = vmul.f32 %v663, 0.01
        %v712 = vmul.f32 %v664, 0.01
        %v713 = vmul.f32 %v665, 0.01
        %v714 = vmul.f32 %v666, 0.01
        %v715 = vmul.f32 %v667, 0.01
        %v716 = vmul.f32 %v668, 0.01
        %v717 = vmul.f32 %v669, 0.01
        %v718 = vmul.f32 %v670, 0.01
        %v719 = vmul.f32 %v671, 0.01
        %v720 = vmul.f32 %v672, 0.01
        %v721 = vmul.f32 %v673, 0.01
        %v722 = vmul.f32 %v674, 0.01
        %v723 = vmul.f32 %v675, 0.01
        %v724 = vmul.f32 %v676, 0.01
        %v725 = vmul.f32 %v677, 0.01
        %v726 = vmul.f32 %v678, 0.01
        %v727 = vmul.f32 %v679, 0.01
        %v728 = vmul.f32 %v680, 0.01
        %v729 = vmul.f32 %v681, 0.01
        %v730 = vmul.f32 %v682, 0.01
        %v731 = vmul.f32 %v683, 0.01
        %v732 = vmax.f32 %v636, %v684
        %v733 = vmax.f32 %v637, %v685
        %v734 = vmax.f32 %v638, %v686
        %v735 = vmax.f32 %v639, %v687
        %v736 = vmax.f32 %v640, %v688
        %v737 = vmax.f32 %v641, %v689
        %v738 = vmax.f32 %v642, %v690
        %v739 = vmax.f32 %v643, %v691
        %v740 = vmax.f32 %v644, %v692
        %v741 = vmax.f32 %v645, %v693
        %v742 = vmax.f32 %v646, %v694
        %v743 = vmax.f32 %v647, %v695
        %v744 = vmax.f32 %v648, %v696
        %v745 = vmax.f32 %v649, %v697
        %v746 = vmax.f32 %v650, %v698
        %v747 = vmax.f32 %v651, %v699
        %v748 = vmax.f32 %v652, %v700
        %v749 = vmax.f32 %v653, %v701
        %v750 = vmax.f32 %v654, %v702
        %v751 = vmax.f32 %v655, %v703
        %v752 = vmax.f32 %v656, %v704
        %v753 = vmax.f32 %v657, %v705
        %v754 = vmax.f32 %v658, %v706
        %v755 = vmax.f32 %v659, %v707
        %v756 = vmax.f32 %v660, %v708
        %v757 = vmax.f32 %v661, %v709
        %v758 = vmax.f32 %v662, %v710
        %v759 = vmax.f32 %v663, %v711
        %v760 = vmax.f32 %v664, %v712
        %v761 = vmax.f32 %v665, %v713
        %v762 = vmax.f32 %v666, %v714
        %v763 = vmax.f32 %v667, %v715
        %v764 = vmax.f32 %v668, %v716
        %v765 = vmax.f32 %v669, %v717
        %v766 = vmax.f32 %v670, %v718
        %v767 = vmax.f32 %v671, %v719
        %v768 = vmax.f32 %v672, %v720
        %v769 = vmax.f32 %v673, %v721
        %v770 = vmax.f32 %v674, %v722
        %v771 = vmax.f32 %v675, %v723
        %v772 = vmax.f32 %v676, %v724
        %v773 = vmax.f32 %v677, %v725
        %v774 = vmax.f32 %v678, %v726
        %v775 = vmax.f32 %v679, %v727
        %v776 = vmax.f32 %v680, %v728
        %v777 = vmax.f32 %v681, %v729
        %v778 = vmax.f32 %v682, %v730
        %v779 = vmax.f32 %v683, %v731
        %780 = vst [vmem:[%s204] sm:$0xff] %v732
        %781 = vst [vmem:[%s204 + $0x8] sm:$0xff] %v733
        %782 = vst [vmem:[%s204 + $0x10] sm:$0xff] %v734
        %783 = vst [vmem:[%s204 + $0x18] sm:$0xff] %v735
        %784 = vst [vmem:[%s204 + $0x20] sm:$0xff] %v736
        %785 = vst [vmem:[%s204 + $0x28] sm:$0xff] %v737
        %786 = vst [vmem:[%s204 + $0x30] sm:$0xff] %v738
        %787 = vst [vmem:[%s204 + $0x38] sm:$0xff] %v739
        %788 = vst [vmem:[%s204 + $0x40] sm:$0xff] %v740
        %789 = vst [vmem:[%s204 + $0x48] sm:$0xff] %v741
        %790 = vst [vmem:[%s204 + $0x50] sm:$0xff] %v742
        %791 = vst [vmem:[%s204 + $0x58] sm:$0xff] %v743
        %792 = vst [vmem:[%s204 + $0x60] sm:$0xff] %v744
        %793 = vst [vmem:[%s204 + $0x68] sm:$0xff] %v745
        %794 = vst [vmem:[%s204 + $0x70] sm:$0xff] %v746
        %795 = vst [vmem:[%s204 + $0x78] sm:$0xff] %v747
        %796 = vst [vmem:[%s204 + $0x80] sm:$0xff] %v748
        %797 = vst [vmem:[%s204 + $0x88] sm:$0xff] %v749
        %798 = vst [vmem:[%s204 + $0x90] sm:$0xff] %v750
        %799 = vst [vmem:[%s204 + $0x98] sm:$0xff] %v751
        %800 = vst [vmem:[%s204 + $0xa0] sm:$0xff] %v752
        %801 = vst [vmem:[%s204 + $0xa8] sm:$0xff] %v753
        %802 = vst [vmem:[%s204 + $0xb0] sm:$0xff] %v754
        %803 = vst [vmem:[%s204 + $0xb8] sm:$0xff] %v755
        %804 = vst [vmem:[%s204 + $0xc0] sm:$0xff] %v756
        %805 = vst [vmem:[%s204 + $0xc8] sm:$0xff] %v757
        %806 = vst [vmem:[%s204 + $0xd0] sm:$0xff] %v758
        %807 = vst [vmem:[%s204 + $0xd8] sm:$0xff] %v759
        %808 = vst [vmem:[%s204 + $0xe0] sm:$0xff] %v760
        %809 = vst [vmem:[%s204 + $0xe8] sm:$0xff] %v761
        %810 = vst [vmem:[%s204 + $0xf0] sm:$0xff] %v762
        %811 = vst [vmem:[%s204 + $0xf8] sm:$0xff] %v763
        %812 = vst [vmem:[%s204 + $0x100] sm:$0xff] %v764
        %813 = vst [vmem:[%s204 + $0x108] sm:$0xff] %v765
        %814 = vst [vmem:[%s204 + $0x110] sm:$0xff] %v766
        %815 = vst [vmem:[%s204 + $0x118] sm:$0xff] %v767
        %816 = vst [vmem:[%s204 + $0x120] sm:$0xff] %v768
        %817 = vst [vmem:[%s204 + $0x128] sm:$0xff] %v769
        %818 = vst [vmem:[%s204 + $0x130] sm:$0xff] %v770
        %819 = vst [vmem:[%s204 + $0x138] sm:$0xff] %v771
        %820 = vst [vmem:[%s204 + $0x140] sm:$0xff] %v772
        %821 = vst [vmem:[%s204 + $0x148] sm:$0xff] %v773
        %822 = vst [vmem:[%s204 + $0x150] sm:$0xff] %v774
        %823 = vst [vmem:[%s204 + $0x158] sm:$0xff] %v775
        %824 = vst [vmem:[%s204 + $0x160] sm:$0xff] %v776
        %825 = vst [vmem:[%s204 + $0x168] sm:$0xff] %v777
        %826 = vst [vmem:[%s204 + $0x170] sm:$0xff] %v778
        %827 = vst [vmem:[%s204 + $0x178] sm:$0xff] %v779
        %s828 = sand.u32 %s97, 1
        %s829 = scalar_lea.sflag [#allocation4], %s828
        %s830 = sand.u32 %s97, 1
        %s831 = smul.addr %s830, 384
        %s832 = scalar_lea.vmem [#allocation7], %s831
        // Predicated region
        $region41: #{tpu_custom_call.1} parent=31 // pred_check
          %p833 = pneg %p107
        $region42: #{tpu_custom_call.1} parent=31 // pred_check_branch
          %835 = sbr.rel (%p833) target = $region44
        $region43: #{tpu_custom_call.1} parent=31 // pred_region
          %s836 = smul.u32 24, %s21
          %s838 = ssub.s32 6144, 6144
          %839 = vsyncadd %s829, %s838
          %s840 = smul.addr %s836, 2
          %s841 = smul.addr %s840, 128
          %s842 = scalar_lea.hbm %s3, %s841
          %s843 = sshll.u32 %s832, 4
          %s844 = int_to_ptr.vmem [resolvable:$true] %s843
          %849 = dma.vmem_to_hbm [thread:$0]  %s844, 6144, %s842, %s829, 256, 256, 16
        $region44: #{tpu_custom_call.1} parent=31 // pred_fallthru
          _
      $region32: #{tpu_custom_call.1} parent=5 // pred_fallthru
        _
      %p850 = scmp.le.s32.totalorder 2, %s16
      // Predicated region
      $region45: #{tpu_custom_call.1} parent=5 // pred_check
        %p851 = pneg %p850
      $region46: #{tpu_custom_call.1} parent=5 // pred_check_branch
        %853 = sbr.rel (%p851) target = $region48
      $region47: #{tpu_custom_call.1} parent=5 // pred_region
        %s854 = ssub.s32 %s16, 2
        // Predicated region
        $region49: #{tpu_custom_call.1} parent=47 // pred_check
          %p855 = pneg %p113
        $region50: #{tpu_custom_call.1} parent=47 // pred_check_branch
          %857 = sbr.rel (%p855) target = $region52
        $region51: #{tpu_custom_call.1} parent=47 // pred_region
          %s858 = sand.u32 %s98, 1
          %s859 = scalar_lea.sflag [#allocation4], %s858
          %s860 = sand.u32 %s98, 1
          %s861 = smul.addr %s860, 384
          %s862 = scalar_lea.vmem [#allocation7], %s861
          %863 = dma.done %s859, 6144
        $region52: #{tpu_custom_call.1} parent=47 // pred_fallthru
          _
      $region48: #{tpu_custom_call.1} parent=5 // pred_fallthru
        _
    $region6: #{tpu_custom_call.1} parent=1 // loop_footer
      %s20 = sadd.s32 1, %s16
    $region7: #{tpu_custom_call.1} parent=1 // loop_footer_branch
      %15 = sbr.rel target = $region3
    $region8: #{tpu_custom_call.1} parent=1 // loop_exit
      _
    %864 = vsyncpa [#allocation3], 1
    %s865 = scalar_lea.sflag [#allocation3], 1
    %866 = vsyncpa %s865, 1
    %867 = vsyncpa [#allocation6], 1
    %868 = vsyncpa [#allocation4], 1
    %s869 = scalar_lea.sflag [#allocation4], 1
    %870 = vsyncpa %s869, 1

</llo_original>
